<compile_context>
chip_gen: v7x
topology: tpu7x:2x2x1
jax: 0.10.0
libtpu: 0.0.40
codegen_flags: <defaults>
</compile_context>

<pallas_src>
import jax
import jax.numpy as jnp
import numpy as np
from jax.experimental import pallas as pl
from jax.experimental.pallas import tpu as pltpu

_LANE = 128        # lanes per vreg
_SUBLANE = 8       # sublanes per vreg (32-bit elements)
_MAX_WIDTH = 8192  # widest lane-dense slab we use
_MAX_BLOCK_BYTES = 4 * 1024 * 1024  # per-block VMEM budget (x2 arrays x2 buffers)


# ---------------------------------------------------------------------------
# Kernel: elementwise reciprocal on a lane-dense (tile_rows, width) tile.
# ---------------------------------------------------------------------------
def _inv_kernel(x_ref, o_ref):
    o_ref[...] = 1.0 / x_ref[...]


def _round_up(a, b):
    return ((a + b - 1) // b) * b


# ---------------------------------------------------------------------------
# Wrapper: flatten -> lane-dense 2-D slab -> tiled pallas_call -> reshape back
# ---------------------------------------------------------------------------
def inv_pallas(x):
    """Elementwise 1.0 / x via a tiled Pallas TPU kernel (any input shape)."""
    orig_shape = x.shape
    n = int(np.prod(orig_shape)) if orig_shape else 1

    # PyTorch: 1.0 / int_tensor -> float tensor; keep float dtypes as-is.
    if not jnp.issubdtype(x.dtype, jnp.floating):
        x = x.astype(jnp.float32)
    dtype = x.dtype
    itemsize = jnp.dtype(dtype).itemsize
    # Sublane multiple for this dtype (f32 -> 8, bf16 -> 16, int8/fp8 -> 32).
    sub_mult = _SUBLANE * max(1, 4 // itemsize)

    xf = x.reshape(-1)

    # Lane-dense width: multiple of 128, grown while the data still fills at
    # least a full vreg's worth of sublanes at the wider width.
    width = _LANE
    while width * 2 <= _MAX_WIDTH and n >= width * 2 * sub_mult:
        width *= 2

    rows = pl.cdiv(n, width)

    # Row-tile: multiple of the sublane packing, capped by the VMEM budget.
    max_rows = max(sub_mult, (_MAX_BLOCK_BYTES // (width * itemsize)))
    max_rows = (max_rows // sub_mult) * sub_mult
    tile_rows = min(_round_up(rows, sub_mult), max_rows)
    rows_padded = _round_up(rows, tile_rows)

    pad = rows_padded * width - n
    if pad:
        # Pad with ones (not zeros) so no spurious inf is ever produced;
        # padded lanes are sliced off below.
        xf = jnp.concatenate([xf, jnp.ones((pad,), dtype)])
    x2d = xf.reshape(rows_padded, width)

    grid = (rows_padded // tile_rows,)
    nbytes = rows_padded * width * itemsize

    out2d = pl.pallas_call(
        _inv_kernel,
        out_shape=jax.ShapeDtypeStruct((rows_padded, width), dtype),
        grid=grid,
        in_specs=[pl.BlockSpec((tile_rows, width), lambda i: (i, 0))],
        out_specs=pl.BlockSpec((tile_rows, width), lambda i: (i, 0)),
        compiler_params=pltpu.CompilerParams(
            dimension_semantics=("parallel",),   # shardable across TCs (v7x)
            vmem_limit_bytes=32 * 1024 * 1024,   # <= 16 MiB actually used
        ),
        cost_estimate=pl.CostEstimate(
            flops=rows_padded * width,
            transcendentals=0,
            bytes_accessed=2 * nbytes,
        ),
    )(x2d)

    return out2d.reshape(-1)[:n].reshape(orig_shape)


# ---------------------------------------------------------------------------
# main
# ---------------------------------------------------------------------------
if __name__ == "__main__":
    key = jax.random.PRNGKey(0)
    k_mag, k_sign, k_mag2, k_sign2 = jax.random.split(key, 4)

    # Inv(dims=(4, 16, 16)) applied to x of shape (N, C, H, W) = (2, 4, 16, 16).
    dims = (4, 16, 16)
    deepz_lambda = -jnp.ones(dims, jnp.float32)  # module parameter; unused on the concrete path
    # TODO(synk): HybridZonotope branch (x.inv(deepz_lambda, bounds)) has no
    # concrete-tensor Pallas equivalent and is not implemented.

    shape = (2,) + dims
    mag = jax.random.uniform(k_mag, shape, jnp.float32, 0.5, 1.5)
    sign = jnp.where(jax.random.bernoulli(k_sign, 0.5, shape), 1.0, -1.0)
    x = mag * sign                                # bounded away from zero

    out = jax.block_until_ready(inv_pallas(x))
    ref = 1.0 / x
    np.testing.assert_allclose(np.asarray(out), np.asarray(ref),
                               rtol=1e-5, atol=1e-6)
    assert out.shape == shape and out.dtype == x.dtype

    # Odd-sized input to exercise the padding / slice-back path.
    shape2 = (3, 5, 37)
    mag2 = jax.random.uniform(k_mag2, shape2, jnp.float32, 0.5, 1.5)
    sign2 = jnp.where(jax.random.bernoulli(k_sign2, 0.5, shape2), 1.0, -1.0)
    x2 = mag2 * sign2
    out2 = jax.block_until_ready(inv_pallas(x2))
    np.testing.assert_allclose(np.asarray(out2), np.asarray(1.0 / x2),
                               rtol=1e-5, atol=1e-6)

    # bf16 path (native-dtype compute, (16,128) sublane packing).
    x3 = (mag * sign).astype(jnp.bfloat16)
    out3 = jax.block_until_ready(inv_pallas(x3))
    np.testing.assert_allclose(np.asarray(out3, np.float32),
                               np.asarray(1.0 / x3, np.float32),
                               rtol=2e-2, atol=2e-2)
    assert out3.dtype == jnp.bfloat16

    print("KERNEL_OK")
</pallas_src>

<mosaic_0001>
module attributes {stable_mosaic.version = 11 : i64} {
  func.func @_inv_kernel(%arg0: i32, %arg1: memref<8x256xf32, #tpu.memory_space<vmem>>, %arg2: memref<8x256xf32, #tpu.memory_space<vmem>>) attributes {dimension_semantics = [#tpu.dimension_semantics<parallel>], iteration_bounds = array<i64: 1>, scalar_prefetch = 0 : i64, scratch_operands = 0 : i64, tpu.core_type = #tpu.core_type<tc>, window_params = [{transform_indices = @transform_0, window_bounds = array<i64: 8, 256>}, {transform_indices = @transform_1, window_bounds = array<i64: 8, 256>}]} {
    %c0 = arith.constant 0 : index
    %c0_0 = arith.constant 0 : index
    %0 = vector.load %arg1[%c0, %c0_0] : memref<8x256xf32, #tpu.memory_space<vmem>>, vector<8x256xf32>
    %cst = arith.constant 1.000000e+00 : f32
    %1 = vector.broadcast %cst : f32 to vector<8x256xf32>
    %2 = arith.divf %1, %0 : vector<8x256xf32>
    %c0_1 = arith.constant 0 : index
    %c0_2 = arith.constant 0 : index
    %3 = vector.load %arg2[%c0_1, %c0_2] : memref<8x256xf32, #tpu.memory_space<vmem>>, vector<8x256xf32>
    tpu.vector_store %arg2[%c0_1, %c0_2], %2 {strides = array<i32>} : memref<8x256xf32, #tpu.memory_space<vmem>>, vector<8x256xf32>,
    return
  }
  func.func @transform_0(%arg0: i32) -> (i32, i32) {
    %c0_i32 = arith.constant 0 : i32
    %c0_i32_0 = arith.constant 0 : i32
    return %arg0, %c0_i32 : i32, i32
  }
  func.func @transform_1(%arg0: i32) -> (i32, i32) {
    %c0_i32 = arith.constant 0 : i32
    %c0_i32_0 = arith.constant 0 : i32
    return %arg0, %c0_i32 : i32, i32
  }
}

</mosaic_0001>

<llo_original>
// kernel: tpu_custom_call.1
$region0: #{tpu_custom_call.1}
  #allocation0 [shape = 'u32[]', space=smem, size = 0x4, offset = 0x4, fixed_abs, tag = 'smem constant byte address 0x4 - core index']
  #allocation1 [shape = 'u32[144,128]{1,0:T(1,128)}', space=vmem, size = 0x12000, scoped, tag = 'internal scratch']
  %s0 = inlined_call_operand.hbm [shape: f32[8,256], index: 0, kind: input, shape index: {}]
  %s1 = inlined_call_operand.hbm [shape: f32[8,256], index: 1, kind: output, shape index: {}]
  %s2 = sld [smem:[#allocation0]]
  $region18: #{tpu_custom_call.1} parent=0
    _
  %s4 = ssub.s32 1, %s2
  %s5 = scalar_select 0, %s4, %s2
  $region1: #{tpu_custom_call.1} parent=0
    #allocation2 [shape = 'u8[8192]{0}', space=vmem, size = 0x2000, scoped, tag = 'input window, operand 0, single buffered']
    #allocation3 [shape = 's32[1]{0}', space=sflag, size = 0x4, scoped, tag = 'scoped memory for tpu_custom_call.1']
    #allocation4 [shape = 's32[1]{0}', space=sflag, size = 0x4, scoped, tag = 'scoped memory for tpu_custom_call.1']
    #allocation5 [shape = 'u8[8192]{0}', space=vmem, size = 0x2000, scoped, tag = 'output window, operand 0, single buffered']
    %6 = vsyncpa [#allocation3], 0
    %7 = vsyncpa [#allocation4], 0
    // Predicated region
    $region2: #{tpu_custom_call.1} parent=1 // pred_check
      _
    $region3: #{tpu_custom_call.1} parent=1 // pred_check_branch
      %9 = sbr.rel (0) target = $region5
    $region4: #{tpu_custom_call.1} parent=1 // pred_region
      %s11 = ssub.s32 256, 256
      %12 = vsyncadd [#allocation3], %s11
      %s14 = sshll.u32 [#allocation2], 4
      %s15 = int_to_ptr.vmem [resolvable:$true] %s14
      %17 = dma.hbm_to_vmem [thread:$0]  %s0, 256, %s15, [#allocation3]
    $region5: #{tpu_custom_call.1} parent=1 // pred_fallthru
      _
    // Predicated region
    $region6: #{tpu_custom_call.1} parent=1 // pred_check
      _
    $region7: #{tpu_custom_call.1} parent=1 // pred_check_branch
      %19 = sbr.rel (0) target = $region9
    $region8: #{tpu_custom_call.1} parent=1 // pred_region
      %20 = dma.done [#allocation3], 256
    $region9: #{tpu_custom_call.1} parent=1 // pred_fallthru
      _
    %v21 = vld [vmem:[#allocation2] sm:$0xff]
    %v22 = vld [vmem:[#allocation2 + $0x8] sm:$0xff]
    %v23 = vrcp.pop %v21
    %v24 = vmul.f32 1.0, %v23
    %v25 = vrcp.pop %v22
    %v26 = vmul.f32 1.0, %v25
    %27 = vst [vmem:[#allocation5] sm:$0xff] %v24
    %28 = vst [vmem:[#allocation5 + $0x8] sm:$0xff] %v26
    // Predicated region
    $region10: #{tpu_custom_call.1} parent=1 // pred_check
      _
    $region11: #{tpu_custom_call.1} parent=1 // pred_check_branch
      %30 = sbr.rel (0) target = $region13
    $region12: #{tpu_custom_call.1} parent=1 // pred_region
      %s32 = ssub.s32 256, 256
      %33 = vsyncadd [#allocation4], %s32
      %s35 = sshll.u32 [#allocation5], 4
      %s36 = int_to_ptr.vmem [resolvable:$true] %s35
      %38 = dma.vmem_to_hbm [thread:$0]  %s36, 256, %s1, [#allocation4]
    $region13: #{tpu_custom_call.1} parent=1 // pred_fallthru
      _
    // Predicated region
    $region14: #{tpu_custom_call.1} parent=1 // pred_check
      _
    $region15: #{tpu_custom_call.1} parent=1 // pred_check_branch
      %40 = sbr.rel (0) target = $region17
    $region16: #{tpu_custom_call.1} parent=1 // pred_region
      %41 = dma.done [#allocation4], 256
    $region17: #{tpu_custom_call.1} parent=1 // pred_fallthru
      _
    %42 = vsyncpa [#allocation3], 1
    %43 = vsyncpa [#allocation4], 1

</llo_original>
